<compile_context>
chip_gen: v6e
topology: v6e:2x2x1
jax: 0.10.0
libtpu: 0.0.40
codegen_flags: <defaults>
</compile_context>

<pallas_src>
import jax
import jax.numpy as jnp
from jax.experimental import pallas as pl
from jax.experimental.pallas import tpu as pltpu

B, T, E = 2, 8, 4            # batch, behavior seq len, embedding_dim (module default 4)
H1, H2 = 80, 40              # hidden_unit=[80, 40]
EPS = 1e-9                   # Dice BatchNorm eps


# --------------------------------------------------------------------------- #
# Kernel: one block, N = B*T rows, 2 input DMAs, 1 MXU dot.
# --------------------------------------------------------------------------- #
def lau_kernel(x_ref, pb_ref, out_ref):
    x = x_ref[...]                            # (N, 3E)  packed [q | ub | q*ub]
    w1 = pb_ref[0]                            # (3E, H1) folded first-layer weight
    v = pb_ref[1]                             # (3E, H1) per-channel vectors (rows 0..5)

    b1 = v[0:1, :]                            # (1, H1)
    alpha = v[1:2, :]                         # (1, H1)  Dice alpha
    gamma = v[2:3, :]                         # (1, H1)  BN weight
    beta = v[3:4, :]                          # (1, H1)  BN bias
    w23 = v[4:5, :]                           # (1, H1)  fused (W2 @ W3)^T
    b23 = v[5:6, 0:1]                         # (1, 1)   fused b2 @ W3 + b3

    # Linear(4E -> H1) with the concat folded into a single K = 3E dot.
    h = jnp.dot(x, w1, preferred_element_type=jnp.float32) + b1        # (N, H1)

    # Dice(dim=3): BatchNorm1d over all N = B*T positions per channel
    # (training-mode batch statistics, biased variance), then gated identity.
    # Note: lax.rsqrt is the full-precision EUP rsqrt (not the approx path);
    # matches 1/sqrt to ~1 ulp.
    mean = jnp.mean(h, axis=0, keepdims=True)                          # (1, H1)
    var = jnp.mean((h - mean) ** 2, axis=0, keepdims=True)             # (1, H1)
    xn = (h - mean) * jax.lax.rsqrt(var + EPS) * gamma + beta
    p = jax.nn.sigmoid(xn)
    hd = (alpha * (1.0 - p) + p) * h                                   # (N, H1)

    # Fused Linear(80->40) -> Linear(40->1): hd @ (W2@W3) + (b2@W3 + b3).
    # (N,1) output is fine at this size; make it lane-dense once tiled/gridded.
    out_ref[...] = jnp.sum(hd * w23, axis=1, keepdims=True) + b23      # (N, 1)


# --------------------------------------------------------------------------- #
# One-time parameter folding ("module init") — NOT on the per-call path.
# --------------------------------------------------------------------------- #
def prepare_params(p, e=E):
    """Fold all weights into a single (2, 3E, H1) parameter block."""
    w1 = p["w1"]                                                   # (4E, H1)
    # x@W1 = q@(W1[:E]+W1[2E:3E]) + ub@(W1[E:2E]-W1[2E:3E]) + (q*ub)@W1[3E:]
    w_q = w1[0 * e:1 * e, :] + w1[2 * e:3 * e, :]
    w_ub = w1[1 * e:2 * e, :] - w1[2 * e:3 * e, :]
    w_prod = w1[3 * e:4 * e, :]
    w1f = jnp.concatenate([w_q, w_ub, w_prod], axis=0)             # (3E, H1)

    # No activation between Linear(80->40) and Linear(40->1), so they fuse.
    w23 = (p["w2"] @ p["w3"]).reshape(1, H1)                       # (1, H1)
    b23 = (p["b2"] @ p["w3"] + p["b3"]).reshape(1, 1)              # (1, 1)

    vecs = jnp.concatenate(
        [p["b1"], p["alpha"], p["gamma"], p["beta"],
         w23, jnp.broadcast_to(b23, (1, H1))],
        axis=0)                                                    # (6, H1)
    vecs = jnp.pad(vecs, ((0, 3 * e - 6), (0, 0)))                 # (3E, H1)

    return jnp.stack([w1f, vecs], axis=0)                          # (2, 3E, H1)


# --------------------------------------------------------------------------- #
# Per-call forward: layout plumbing only, then one pallas_call with 2 inputs.
# --------------------------------------------------------------------------- #
def local_activation_unit(query, user_behavior, pblock):
    b, t, e = user_behavior.shape
    n = b * t

    qe = jnp.broadcast_to(query, (b, t, e)).reshape(n, e)   # query.expand(-1, T, -1)
    ub = user_behavior.reshape(n, e)
    x = jnp.concatenate([qe, ub, qe * ub], axis=-1)         # (N, 3E)

    vspec = pl.BlockSpec(memory_space=pltpu.MemorySpace.VMEM)
    score = pl.pallas_call(
        lau_kernel,
        out_shape=jax.ShapeDtypeStruct((n, 1), jnp.float32),
        in_specs=[vspec, vspec],
        out_specs=vspec,
    )(x, pblock)
    return score.reshape(b, t, 1)


# --------------------------------------------------------------------------- #
# Pure-JAX reference of the original (unfused) forward pass.
# --------------------------------------------------------------------------- #
def reference(query, user_behavior, p):
    qe = jnp.broadcast_to(query, user_behavior.shape)
    x = jnp.concatenate([qe, user_behavior, qe - user_behavior, qe * user_behavior],
                        axis=-1)
    h = x.reshape(-1, 4 * E) @ p["w1"] + p["b1"]
    mean = h.mean(axis=0, keepdims=True)
    var = ((h - mean) ** 2).mean(axis=0, keepdims=True)
    xn = (h - mean) / jnp.sqrt(var + EPS) * p["gamma"] + p["beta"]
    s = jax.nn.sigmoid(xn)
    hd = p["alpha"] * (1.0 - s) * h + s * h
    h2 = hd @ p["w2"] + p["b2"]
    score = h2 @ p["w3"] + p["b3"]
    return score.reshape(B, T, 1)


def make_params(key):
    ks = jax.random.split(key, 8)
    scale = 0.1
    return {
        "w1":    scale * jax.random.normal(ks[0], (4 * E, H1), jnp.float32),
        "b1":    scale * jax.random.normal(ks[1], (1, H1), jnp.float32),
        # PyTorch Dice initializes alpha to zeros; we randomize it here so the
        # test actually exercises the alpha*(1-p) gating path.
        "alpha": scale * jax.random.normal(ks[2], (1, H1), jnp.float32),
        "gamma": jnp.ones((1, H1), jnp.float32),                     # BN weight init
        "beta":  jnp.zeros((1, H1), jnp.float32),                    # BN bias init
        "w2":    scale * jax.random.normal(ks[3], (H1, H2), jnp.float32),
        "b2":    scale * jax.random.normal(ks[4], (1, H2), jnp.float32),
        "w3":    scale * jax.random.normal(ks[5], (H2, 1), jnp.float32),
        "b3":    scale * jax.random.normal(ks[6], (1, 1), jnp.float32),
    }


if __name__ == "__main__":
    key = jax.random.PRNGKey(0)
    kq, kub, kp = jax.random.split(key, 3)
    query = jax.random.normal(kq, (B, 1, E), jnp.float32)
    user_behavior = jax.random.normal(kub, (B, T, E), jnp.float32)
    params = make_params(kp)

    # Folding happens once, outside the per-call forward path.
    pblock = prepare_params(params)

    fwd = jax.jit(local_activation_unit)
    out = jax.block_until_ready(fwd(query, user_behavior, pblock))

    ref = reference(query, user_behavior, params)
    assert out.shape == (B, T, 1)
    assert jnp.allclose(out, ref, atol=1e-4, rtol=1e-4), (out, ref)
    print("KERNEL_OK")
</pallas_src>

<mosaic_0001>
module attributes {stable_mosaic.version = 11 : i64} {
  func.func @lau_kernel(%arg0: memref<16x12xf32, #tpu.memory_space<vmem>>, %arg1: memref<2x12x80xf32, #tpu.memory_space<vmem>>, %arg2: memref<16x1xf32, #tpu.memory_space<vmem>>) attributes {dimension_semantics = [], scalar_prefetch = 0 : i64, scratch_operands = 0 : i64, tpu.core_type = #tpu.core_type<tc>} {
    %c0 = arith.constant 0 : index
    %c0_0 = arith.constant 0 : index
    %0 = vector.load %arg0[%c0, %c0_0] : memref<16x12xf32, #tpu.memory_space<vmem>>, vector<16x12xf32>
    %c0_1 = arith.constant 0 : index
    %c0_2 = arith.constant 0 : index
    %c0_3 = arith.constant 0 : index
    %1 = vector.load %arg1[%c0_1, %c0_2, %c0_3] : memref<2x12x80xf32, #tpu.memory_space<vmem>>, vector<1x12x80xf32>
    %2 = vector.shape_cast %1 : vector<1x12x80xf32> to vector<12x80xf32>
    %c1 = arith.constant 1 : index
    %c0_4 = arith.constant 0 : index
    %c0_5 = arith.constant 0 : index
    %3 = vector.load %arg1[%c1, %c0_4, %c0_5] : memref<2x12x80xf32, #tpu.memory_space<vmem>>, vector<1x12x80xf32>
    %4 = vector.shape_cast %3 : vector<1x12x80xf32> to vector<12x80xf32>
    %5 = vector.extract_strided_slice %4 {offsets = [0, 0], sizes = [1, 80], strides = [1, 1]} : vector<12x80xf32> to vector<1x80xf32>
    %6 = vector.extract_strided_slice %4 {offsets = [1, 0], sizes = [1, 80], strides = [1, 1]} : vector<12x80xf32> to vector<1x80xf32>
    %7 = vector.extract_strided_slice %4 {offsets = [2, 0], sizes = [1, 80], strides = [1, 1]} : vector<12x80xf32> to vector<1x80xf32>
    %8 = vector.extract_strided_slice %4 {offsets = [3, 0], sizes = [1, 80], strides = [1, 1]} : vector<12x80xf32> to vector<1x80xf32>
    %9 = vector.extract_strided_slice %4 {offsets = [4, 0], sizes = [1, 80], strides = [1, 1]} : vector<12x80xf32> to vector<1x80xf32>
    %10 = vector.extract_strided_slice %4 {offsets = [5, 0], sizes = [1, 1], strides = [1, 1]} : vector<12x80xf32> to vector<1x1xf32>
    %cst = arith.constant dense<0.000000e+00> : vector<16x80xf32>
    %11 = tpu.matmul %0, %2, %cst {dimension_numbers = #tpu.dot_dimension_numbers<[1], [0], [0], [1], [0, 0, 1, 1], [], []>} : vector<16x12xf32>, vector<12x80xf32>, vector<16x80xf32> -> vector<16x80xf32>
    %12 = vector.broadcast %5 : vector<1x80xf32> to vector<16x80xf32>
    %13 = arith.addf %11, %12 : vector<16x80xf32>
    %cst_6 = arith.constant dense<0.000000e+00> : vector<80xf32>
    %14 = vector.multi_reduction <add>, %13, %cst_6 [0] : vector<16x80xf32> to vector<80xf32>
    %15 = vector.shape_cast %14 : vector<80xf32> to vector<1x80xf32>
    %cst_7 = arith.constant 1.600000e+01 : f32
    %16 = vector.broadcast %cst_7 : f32 to vector<1x80xf32>
    %17 = arith.divf %15, %16 : vector<1x80xf32>
    %18 = vector.broadcast %17 : vector<1x80xf32> to vector<16x80xf32>
    %19 = arith.subf %13, %18 : vector<16x80xf32>
    %20 = arith.mulf %19, %19 : vector<16x80xf32>
    %cst_8 = arith.constant dense<0.000000e+00> : vector<80xf32>
    %21 = vector.multi_reduction <add>, %20, %cst_8 [0] : vector<16x80xf32> to vector<80xf32>
    %22 = vector.shape_cast %21 : vector<80xf32> to vector<1x80xf32>
    %cst_9 = arith.constant 1.600000e+01 : f32
    %23 = vector.broadcast %cst_9 : f32 to vector<1x80xf32>
    %24 = arith.divf %22, %23 : vector<1x80xf32>
    %25 = vector.broadcast %17 : vector<1x80xf32> to vector<16x80xf32>
    %26 = arith.subf %13, %25 : vector<16x80xf32>
    %cst_10 = arith.constant 9.99999971E-10 : f32
    %27 = vector.broadcast %cst_10 : f32 to vector<1x80xf32>
    %28 = arith.addf %24, %27 : vector<1x80xf32>
    %29 = math.rsqrt %28 : vector<1x80xf32>
    %30 = vector.broadcast %29 : vector<1x80xf32> to vector<16x80xf32>
    %31 = arith.mulf %26, %30 : vector<16x80xf32>
    %32 = vector.broadcast %7 : vector<1x80xf32> to vector<16x80xf32>
    %33 = arith.mulf %31, %32 : vector<16x80xf32>
    %34 = vector.broadcast %8 : vector<1x80xf32> to vector<16x80xf32>
    %35 = arith.addf %33, %34 : vector<16x80xf32>
    %36 = arith.negf %35 : vector<16x80xf32>
    %37 = math.exp %36 : vector<16x80xf32>
    %cst_11 = arith.constant 1.000000e+00 : f32
    %38 = vector.broadcast %cst_11 : f32 to vector<16x80xf32>
    %39 = arith.addf %38, %37 : vector<16x80xf32>
    %40 = arith.divf %38, %39 : vector<16x80xf32>
    %cst_12 = arith.constant 1.000000e+00 : f32
    %41 = vector.broadcast %cst_12 : f32 to vector<16x80xf32>
    %42 = arith.subf %41, %40 : vector<16x80xf32>
    %43 = vector.broadcast %6 : vector<1x80xf32> to vector<16x80xf32>
    %44 = arith.mulf %43, %42 : vector<16x80xf32>
    %45 = arith.addf %44, %40 : vector<16x80xf32>
    %46 = arith.mulf %45, %13 : vector<16x80xf32>
    %47 = vector.broadcast %9 : vector<1x80xf32> to vector<16x80xf32>
    %48 = arith.mulf %46, %47 : vector<16x80xf32>
    %cst_13 = arith.constant dense<0.000000e+00> : vector<16xf32>
    %49 = vector.multi_reduction <add>, %48, %cst_13 [1] : vector<16x80xf32> to vector<16xf32>
    %50 = vector.shape_cast %49 : vector<16xf32> to vector<16x1xf32>
    %51 = vector.broadcast %10 : vector<1x1xf32> to vector<16x1xf32>
    %52 = arith.addf %50, %51 : vector<16x1xf32>
    %c0_14 = arith.constant 0 : index
    %c0_15 = arith.constant 0 : index
    %53 = vector.load %arg2[%c0_14, %c0_15] : memref<16x1xf32, #tpu.memory_space<vmem>>, vector<16x1xf32>
    tpu.vector_store %arg2[%c0_14, %c0_15], %52 {strides = array<i32>} : memref<16x1xf32, #tpu.memory_space<vmem>>, vector<16x1xf32>,
    return
  }
}

</mosaic_0001>

<llo_original>
// kernel: mul.1
$region0: #{mul.1}
  #allocation0 [shape = 's32[1]{0}', space=sflag, size = 0x4, scoped, tag = 'scoped memory for mul.1']
  %s0 = inlined_call_operand.vmem [shape: f32[16,4], index: 0, kind: input, shape index: {}]
  %s1 = inlined_call_operand.vmem [shape: f32[16,4], index: 1, kind: input, shape index: {}]
  %s2 = inlined_call_operand.vmem [shape: f32[16,4], index: 2, kind: output, shape index: {}]
  %v3 = vld [vmem:[%s0] sm:$0xf]
  %v4 = vld [vmem:[%s1] sm:$0xf]
  %5 = xla_tuple %v3, %v4
  %6 = xla_tuple %5
  %v7 = vmul.f32 %v3, %v4
  %8 = xla_tuple %v7
  %9 = vst [vmem:[%s2] sm:$0xf] %v7

// kernel: local_activation_unit.1
$region0: #{local_activation_unit.1}
  #allocation0 [shape = 'u32[]', space=smem, size = 0x4, offset = 0x4, fixed_abs, tag = 'smem constant byte address 0x4 - core index']
  #allocation1 [shape = 'u32[144,128]{1,0:T(1,128)}', space=vmem, size = 0x12000, scoped, tag = 'internal scratch']
  %s0 = inlined_call_operand.vmem [shape: f32[16,12], index: 0, kind: input, shape index: {}]
  %s1 = inlined_call_operand.vmem [shape: f32[2,12,80], index: 1, kind: input, shape index: {}]
  %s2 = inlined_call_operand.vmem [shape: f32[16,1], index: 2, kind: output, shape index: {}]
  %s3 = sld [smem:[#allocation0]]
  $region18: #{local_activation_unit.1} parent=0
    _
  %s5 = ssub.s32 1, %s3
  %s6 = scalar_select 0, %s5, %s3
  // Predicated region
  $region2: #{local_activation_unit.1} parent=0 // pred_check
    _
  $region3: #{local_activation_unit.1} parent=0 // pred_check_branch
    %8 = sbr.rel (0) target = $region5
  $region4: #{local_activation_unit.1} parent=0 // pred_region
    _
  $region5: #{local_activation_unit.1} parent=0 // pred_fallthru
    _
  // Predicated region
  $region6: #{local_activation_unit.1} parent=0 // pred_check
    _
  $region7: #{local_activation_unit.1} parent=0 // pred_check_branch
    %10 = sbr.rel (0) target = $region9
  $region8: #{local_activation_unit.1} parent=0 // pred_region
    _
  $region9: #{local_activation_unit.1} parent=0 // pred_fallthru
    _
  %v11 = vld [vmem:[%s0] sm:$0xff]
  %v12 = vld [vmem:[%s0 + $0x8] sm:$0xff]
  %v13 = vld [vmem:[%s1] sm:$0xff]
  %v14 = vld [vmem:[%s1 + $0x8] sm:$0xf]
  %s15 = scalar_lea.vmem %s1, 16
  %v16 = vld [vmem:[%s15] sm:$0xff]
  %v17 = vlaneseq
  %v18 = vshrl.u32 %v17, 7
  %v19 = vsub.s32 0, %v18
  %v20 = vrot.slane %v16, %v19
  %vm21 = vcmask 97280
  %v23 = vsel %vm21, %v11, 0
  %v26 = vsel %vm21, %v12, 0
  %vm28 = vcmask 1043456
  %v30 = vsel %vm28, %v14, 0
  %32 = vmatprep.subr.mxu0 0.0
  %33 = vmatpush1.msra.mxu0 0.0
  %34 = vmatprep.subr.mxu0 0.0
  %35 = vmatpush1.msra.mxu0 0.0
  %36 = vmatprep.subr.mxu0 0.0
  %37 = vmatpush1.msra.mxu0 0.0
  %38 = vmatprep.subr.mxu0 0.0
  %39 = vmatpush1.msra.mxu0 0.0
  %40 = vmatprep.subr.mxu0 0.0
  %41 = vmatpush1.msra.mxu0 0.0
  %42 = vmatprep.subr.mxu0 0.0
  %43 = vmatpush1.msra.mxu0 0.0
  %44 = vmatprep.subr.mxu0 0.0
  %45 = vmatpush1.msra.mxu0 0.0
  %46 = vmatprep.subr.mxu0 0.0
  %47 = vmatpush1.msra.mxu0 0.0
  %48 = vmatprep.subr.mxu0 0.0
  %49 = vmatpush1.msra.mxu0 0.0
  %50 = vmatprep.subr.mxu0 0.0
  %51 = vmatpush1.msra.mxu0 0.0
  %52 = vmatprep.subr.mxu0 0.0
  %53 = vmatpush1.msra.mxu0 0.0
  %54 = vmatprep.subr.mxu0 0.0
  %55 = vmatpush1.msra.mxu0 0.0
  %56 = vmatprep.subr.mxu0 0.0
  %57 = vmatpush1.msra.mxu0 0.0
  %58 = vmatprep.subr.mxu0 0.0
  %59 = vmatpush1.msra.mxu0 0.0
  %60 = vmatprep.subr.mxu0 0.0
  %61 = vmatpush1.msra.mxu0 %v30
  %62 = vmatprep.subr.mxu0 0.0
  %63 = vmatpush1.msra.mxu0 %v13
  %64 = vmatprep.subr.mxu0 0.0
  %65 = vmatpush2.msra.mxu0 0.0
  %66 = vmatprep.subr.mxu0 0.0
  %67 = vmatpush2.msra.mxu0 0.0
  %68 = vmatprep.subr.mxu0 0.0
  %69 = vmatpush2.msra.mxu0 0.0
  %70 = vmatprep.subr.mxu0 0.0
  %71 = vmatpush2.msra.mxu0 0.0
  %72 = vmatprep.subr.mxu0 0.0
  %73 = vmatpush2.msra.mxu0 0.0
  %74 = vmatprep.subr.mxu0 0.0
  %75 = vmatpush2.msra.mxu0 0.0
  %76 = vmatprep.subr.mxu0 0.0
  %77 = vmatpush2.msra.mxu0 0.0
  %78 = vmatprep.subr.mxu0 0.0
  %79 = vmatpush2.msra.mxu0 0.0
  %80 = vmatprep.subr.mxu0 0.0
  %81 = vmatpush2.msra.mxu0 0.0
  %82 = vmatprep.subr.mxu0 0.0
  %83 = vmatpush2.msra.mxu0 0.0
  %84 = vmatprep.subr.mxu0 0.0
  %85 = vmatpush2.msra.mxu0 0.0
  %86 = vmatprep.subr.mxu0 0.0
  %87 = vmatpush2.msra.mxu0 0.0
  %88 = vmatprep.subr.mxu0 0.0
  %89 = vmatpush2.msra.mxu0 0.0
  %90 = vmatprep.subr.mxu0 0.0
  %91 = vmatpush2.msra.mxu0 0.0
  %92 = vmatprep.subr.mxu0 0.0
  %93 = vmatpush2.msra.mxu0 0.0
  %94 = vmatprep.subr.mxu0 0.0
  %95 = vmatpush2.msra.mxu0 0.0
  %96 = vmatprep.mubr.f32.mxu0 0.0
  %97 = vmatmul.mubr.f32.gmra.mxu0 %v23
  %v98 = vpop.f32.mrf.mxu0
  %v99 = vadd.f32 %v20, %v98
  %v100 = vpop.f32.mrf.mxu0
  %101 = vmatprep.mubr.f32.mxu0 0.0
  %102 = vmatmul.mubr.f32.gmra.mxu0 %v26
  %v103 = vpop.f32.mrf.mxu0
  %v104 = vadd.f32 %v20, %v103
  %v105 = vpop.f32.mrf.mxu0
  %106 = vdwg.mxu0
  %vm107 = vcmask 654336
  %v108 = vsel %vm107, %v99, 0.0
  %v109 = vsel %vm107, %v104, 0.0
  %v110 = vadd.f32 %v108, %v109
  %v111 = vrot.slane %v110, 4
  %v112 = vadd.f32 %v110, %v111
  %v113 = vrot.slane %v112, 2
  %v114 = vadd.f32 %v112, %v113
  %v115 = vrot.slane %v114, 1
  %v116 = vadd.f32 %v114, %v115
  %v117 = vrcp.pop 16.0
  %v118 = vmul.f32 %v116, %v117
  %v119 = vsub.f32 %v99, %v118
  %v120 = vsub.f32 %v104, %v118
  %v121 = vmul.f32 %v119, %v119
  %v122 = vmul.f32 %v120, %v120
  %v123 = vsel %vm107, %v121, 0.0
  %v124 = vsel %vm107, %v122, 0.0
  %v125 = vadd.f32 %v123, %v124
  %v126 = vrot.slane %v125, 4
  %v127 = vadd.f32 %v125, %v126
  %v128 = vrot.slane %v127, 2
  %v129 = vadd.f32 %v127, %v128
  %v130 = vrot.slane %v129, 1
  %v131 = vadd.f32 %v129, %v130
  %v132 = vmul.f32 %v131, %v117
  %v133 = vadd.f32 %v132, 1e-09
  %v134 = vrsqrt.pop %v133
  %v135 = vmul.f32 %v119, %v134
  %v136 = vmul.f32 %v120, %v134
  %v137 = vlaneseq
  %v138 = vshrl.u32 %v137, 7
  %v139 = vsub.s32 2, %v138
  %v140 = vrot.slane %v16, %v139
  %v141 = vmul.f32 %v135, %v140
  %v142 = vmul.f32 %v136, %v140
  %v143 = vlaneseq
  %v144 = vshrl.u32 %v143, 7
  %v145 = vsub.s32 3, %v144
  %v146 = vrot.slane %v16, %v145
  %v147 = vadd.f32 %v141, %v146
  %v148 = vadd.f32 %v142, %v146
  %v149 = vxor.u32 %v147, 2147483648
  %v150 = vxor.u32 %v148, 2147483648
  %v151 = vmul.f32 %v149, 1.442695
  %v152 = vpow.pop %v151
  %v153 = vmul.f32 %v150, 1.442695
  %v154 = vpow.pop %v153
  %v155 = vadd.f32 %v152, 1.0
  %v156 = vadd.f32 %v154, 1.0
  %v157 = vrcp.pop %v155
  %v158 = vmul.f32 1.0, %v157
  %v159 = vrcp.pop %v156
  %v160 = vmul.f32 1.0, %v159
  %v161 = vsub.f32 1.0, %v158
  %v162 = vsub.f32 1.0, %v160
  %v163 = vlaneseq
  %v164 = vshrl.u32 %v163, 7
  %v165 = vsub.s32 1, %v164
  %v166 = vrot.slane %v16, %v165
  %v167 = vmul.f32 %v166, %v161
  %v168 = vmul.f32 %v166, %v162
  %v169 = vadd.f32 %v167, %v158
  %v170 = vadd.f32 %v168, %v160
  %v171 = vmul.f32 %v169, %v99
  %v172 = vmul.f32 %v170, %v104
  %v173 = vlaneseq
  %v174 = vshrl.u32 %v173, 7
  %v175 = vsub.s32 4, %v174
  %v176 = vrot.slane %v16, %v175
  %v177 = vmul.f32 %v171, %v176
  %v178 = vmul.f32 %v172, %v176
  %v179 = vsel %vm107, %v177, 0.0
  %180 = vadd.xlane.f32.xlu0 %v179
  %v181 = vpop.xlane.xlu0 %180
  %v182 = vsel %vm107, %v178, 0.0
  %183 = vadd.xlane.f32.xlu0 %v182
  %v184 = vpop.xlane.xlu0 %183
  %v185 = vlaneseq
  %v186 = vshrl.u32 %v185, 7
  %v187 = vsub.s32 5, %v186
  %v188 = vrot.slane %v16, %v187
  %v189 = vadd.f32 %v181, %v188
  %v190 = vadd.f32 %v184, %v188
  %vm191 = vcmask 7168
  %192 = vst.msk [vmem:[%s2] sm:$0xff] %vm191, %v189
  %193 = vst.msk [vmem:[%s2 + $0x8] sm:$0xff] %vm191, %v190
  // Predicated region
  $region10: #{local_activation_unit.1} parent=0 // pred_check
    _
  $region11: #{local_activation_unit.1} parent=0 // pred_check_branch
    %195 = sbr.rel (0) target = $region13
  $region12: #{local_activation_unit.1} parent=0 // pred_region
    _
  $region13: #{local_activation_unit.1} parent=0 // pred_fallthru
    _
  // Predicated region
  $region14: #{local_activation_unit.1} parent=0 // pred_check
    _
  $region15: #{local_activation_unit.1} parent=0 // pred_check_branch
    %197 = sbr.rel (0) target = $region17
  $region16: #{local_activation_unit.1} parent=0 // pred_region
    _
  $region17: #{local_activation_unit.1} parent=0 // pred_fallthru
    _

</llo_original>
